<compile_context>
chip_gen: v7x
topology: tpu7x:2x2x1
jax: 0.10.0
libtpu: 0.0.40
codegen_flags: <defaults>
</compile_context>

<pallas_src>
import functools

import jax
import jax.numpy as jnp
from jax import lax
from jax.experimental import pallas as pl
from jax.experimental.pallas import tpu as pltpu

_INV_SQRT2 = 0.7071067811865476        # 1/sqrt(2)
_SQRT_2_OVER_PI = 0.7978845608028654   # sqrt(2/pi) for tanh-approx GELU
_GELU_TANH_A = 0.044715

# Resident (constant-index) blocks at least this big are single-buffered:
# they are never re-fetched across grid steps, so double-buffering them only
# wastes VMEM (matters for large cout, especially under v7x's 64 MiB VMEM).
_RESIDENT_SINGLE_BUFFER_BYTES = 1 << 20


def _round_up(v: int, m: int) -> int:
    return (v + m - 1) // m * m


@functools.lru_cache(maxsize=1)
def _vmem_capacity_bytes() -> int:
    """Per-core VMEM capacity; conservative fallback if the query fails."""
    try:
        return int(pltpu.get_tpu_info().vmem_capacity_bytes)
    except Exception:
        return 64 * 1024 * 1024  # v7x per-TensorCore VMEM (smallest of the three)


def _gelu(x, approximate: bool):
    if approximate:
        # tanh-approx GELU (== torch GELU(approximate='tanh')): the tanh runs on
        # the EUP (its own VLIW slot) and the polynomial stays in x.dtype, so on
        # v6e/v7x the whole activation phase runs in bf16 on otherwise-idle units.
        c = jnp.asarray(_SQRT_2_OVER_PI, x.dtype)
        a = jnp.asarray(_GELU_TANH_A, x.dtype)
        return 0.5 * x * (1.0 + jnp.tanh(c * (x + a * x * x * x)))
    # Exact erf GELU (== torch nn.GELU() default).  erf is evaluated in f32
    # (it lowers to a VPU polynomial); result is cast back to x.dtype.
    xf = x.astype(jnp.float32)
    return (0.5 * xf * (1.0 + lax.erf(xf * _INV_SQRT2))).astype(x.dtype)


def _unet_down_kernel(x_ref, w1_ref, b1_ref, w2_ref, b2_ref, o_ref, *,
                      approximate, elem_dtype):
    """One row tile of GELU(GELU(x @ W1 + b1) @ W2 + b2), f32 MXU accumulation."""
    x = x_ref[...]                                                   # (tm, cin_p)
    h = jnp.dot(x, w1_ref[...], preferred_element_type=jnp.float32)  # f32 accum
    h = h.astype(elem_dtype) + b1_ref[...]                           # elementwise dtype
    h = _gelu(h, approximate)
    h = h.astype(w2_ref.dtype)                                       # no-op when elem==compute
    y = jnp.dot(h, w2_ref[...], preferred_element_type=jnp.float32)
    y = y.astype(elem_dtype) + b2_ref[...]
    o_ref[...] = _gelu(y, approximate).astype(o_ref.dtype)


def _pick_row_tiling(m: int, tile_m_max: int, row_align: int):
    """Balanced row tiling: choose the number of grid steps first, then the
    smallest aligned tile that covers m (padding bounded per tile, not per m)."""
    grid_m = max(1, pl.cdiv(m, tile_m_max))
    # v7x has 2 TensorCores: give the "parallel" row axis >= 2 steps whenever
    # there is enough work to split (one extra grid step only costs ~0.35 us).
    if grid_m == 1 and m >= 256:
        grid_m = 2
    tile_raw = pl.cdiv(m, grid_m)
    # Prefer MXU-friendly M multiples (256 for v6e/v7x, 128 for v5e) when that
    # does not blow up padding; otherwise just the sublane-packing alignment.
    align = row_align
    for cand in (256, 128):
        if tile_raw >= cand and _round_up(tile_raw, cand) * grid_m - m <= max(cand, m // 16):
            align = cand
            break
    tile_m = _round_up(tile_raw, align)
    return grid_m, tile_m, grid_m * tile_m


def _resident_spec(block_shape, nbytes):
    """BlockSpec for a block that is identical at every grid step (weights/bias).
    Large resident blocks are single-buffered: never re-fetched, so the default
    double-buffering only costs VMEM (review: halves resident-weight footprint)."""
    index_map = lambda i: (0, 0)
    if nbytes >= _RESIDENT_SINGLE_BUFFER_BYTES:
        try:
            return pl.BlockSpec(block_shape, index_map, pipeline_mode=pl.Buffered(1))
        except TypeError:
            pass  # jax without BlockSpec.pipeline_mode: degrade gracefully
    return pl.BlockSpec(block_shape, index_map)


def prepare_params(w1, b1, w2, b2, *, compute_dtype=jnp.bfloat16,
                   elementwise_dtype=None):
    """Pad channel dims to lane multiples (128) and cast ONCE, outside the
    per-call hot path.  Pass the result to unet_down(..., out_channels=Cout)."""
    cin, cout = w1.shape
    cin_p = _round_up(max(cin, 128), 128)
    cout_p = _round_up(max(cout, 128), 128)
    elem_dtype = compute_dtype if elementwise_dtype is None else elementwise_dtype
    w1p = jnp.pad(w1, ((0, cin_p - cin), (0, cout_p - cout))).astype(compute_dtype)
    w2p = jnp.pad(w2, ((0, cout_p - cout), (0, cout_p - cout))).astype(compute_dtype)
    b1p = jnp.pad(b1, (0, cout_p - cout)).astype(elem_dtype).reshape(1, cout_p)
    b2p = jnp.pad(b2, (0, cout_p - cout)).astype(elem_dtype).reshape(1, cout_p)
    return w1p, b1p, w2p, b2p


@functools.partial(
    jax.jit,
    static_argnames=("tile_m_max", "compute_dtype", "elementwise_dtype",
                     "approximate_gelu", "out_dtype", "out_channels"),
)
def unet_down(x, w1, b1, w2, b2, *, tile_m_max=512,
              compute_dtype=jnp.bfloat16, elementwise_dtype=None,
              approximate_gelu=None, out_dtype=None, out_channels=None):
    """UnetDown forward: x (..., Cin) -> (..., Cout), both Linear+GELU layers fused.

    compute_dtype      matmul-input dtype.  bfloat16 is recommended on *all* of
                       v5e/v6e/v7x (bf16-native MXU, half the x/W traffic);
                       float32 gives a bit-exact match with the f32 reference.
    elementwise_dtype  dtype of the bias-add / GELU phase.  Defaults to
                       compute_dtype (bf16 VPU/EUP on v6e/v7x).  On v5e pass
                       jnp.float32 (no bf16 VALU/EUP there).
    approximate_gelu   None -> tanh-approx GELU (EUP) when the elementwise dtype
                       is low precision, exact erf GELU for float32.
    out_dtype          output dtype (defaults to x.dtype); bf16 halves output
                       writeback + out-tile VMEM if the consumer allows it.
    out_channels       logical Cout; pass it when weights were pre-padded with
                       prepare_params().
    """
    orig_shape = x.shape
    out_dt = x.dtype if out_dtype is None else out_dtype
    elem_dtype = compute_dtype if elementwise_dtype is None else elementwise_dtype
    approx = (jnp.dtype(elem_dtype) != jnp.dtype(jnp.float32)
              if approximate_gelu is None else approximate_gelu)

    cin = orig_shape[-1]
    cout = w1.shape[1] if out_channels is None else out_channels

    x2d = x.reshape(-1, cin)
    m = x2d.shape[0]

    # Lane-dense channel padding (multiples of 128): unmasked stores, full MXU tiles.
    cin_p = _round_up(max(cin, 128), 128)
    cout_p = _round_up(max(cout, 128), 128)

    # Balanced row tiles (bf16 packs 2 rows per sublane -> 16-row alignment).
    row_align = 16 if jnp.dtype(compute_dtype).itemsize < 4 else 8
    grid_m, tile_m, m_p = _pick_row_tiling(m, tile_m_max, row_align)

    # --- operand preparation (all branches are trace-time no-ops for inputs that
    # were already padded/cast via prepare_params).  Zero padding keeps the math
    # exact: padded x columns hit zero W1 rows, padded hidden lanes are GELU(0)=0
    # into zero W2 rows, and padded output rows/lanes are sliced off below.
    x2d = x2d.astype(compute_dtype)  # cast BEFORE padding: half the pad byte traffic
    if (m_p, cin_p) != (m, cin):
        x2d = jnp.pad(x2d, ((0, m_p - m), (0, cin_p - cin)))

    if w1.shape != (cin_p, cout_p):
        w1 = jnp.pad(w1, ((0, cin_p - w1.shape[0]), (0, cout_p - w1.shape[1])))
    if w2.shape != (cout_p, cout_p):
        w2 = jnp.pad(w2, ((0, cout_p - w2.shape[0]), (0, cout_p - w2.shape[1])))
    w1 = w1.astype(compute_dtype)
    w2 = w2.astype(compute_dtype)

    b1 = jnp.asarray(b1).reshape(1, -1)
    b2 = jnp.asarray(b2).reshape(1, -1)
    if b1.shape[1] != cout_p:
        b1 = jnp.pad(b1, ((0, 0), (0, cout_p - b1.shape[1])))
    if b2.shape[1] != cout_p:
        b2 = jnp.pad(b2, ((0, 0), (0, cout_p - b2.shape[1])))
    b1 = b1.astype(elem_dtype)
    b2 = b2.astype(elem_dtype)

    in_bytes = jnp.dtype(compute_dtype).itemsize
    out_bytes = jnp.dtype(out_dt).itemsize
    elem_bytes = jnp.dtype(elem_dtype).itemsize

    w_bytes = (cin_p + cout_p) * cout_p * in_bytes
    w_buffers = 1 if w_bytes >= _RESIDENT_SINGLE_BUFFER_BYTES else 2
    vmem_need = (
        2 * tile_m * cin_p * in_bytes          # x tile (double-buffered)
        + 2 * tile_m * cout_p * out_bytes      # out tile (double-buffered)
        + w_buffers * w_bytes                  # resident W1 + W2
        + 4 * cout_p * elem_bytes              # biases
        + 4 * tile_m * cout_p * 4              # f32 accumulators / temporaries
    )
    cap = _vmem_capacity_bytes()
    # 75% of this generation's VMEM (96 MiB on v5e/v6e, 48 MiB on v7x).
    vmem_limit = int(min(0.75 * cap, max(2 * vmem_need, 32 * 1024 * 1024)))
    # TODO(synk): for very large cout (resident W1+W2 approaching ~0.5*cap, e.g.
    # cout_p >= 2048 bf16 on v7x) add an output-column grid axis tiling W2/b2/out
    # instead of keeping W2 fully resident.

    cost = pl.CostEstimate(
        flops=2 * m * cin * cout + 2 * m * cout * cout,
        # exact erf lowers to a VPU polynomial, not a transcendental
        transcendentals=(2 * m * cout) if approx else 0,
        bytes_accessed=(m_p * cin_p * in_bytes + m_p * cout_p * out_bytes
                        + w_bytes + 4 * cout_p * elem_bytes),
    )

    out = pl.pallas_call(
        functools.partial(_unet_down_kernel, approximate=approx, elem_dtype=elem_dtype),
        out_shape=jax.ShapeDtypeStruct((m_p, cout_p), out_dt),
        grid_spec=pltpu.PrefetchScalarGridSpec(
            num_scalar_prefetch=0,
            grid=(grid_m,),
            in_specs=[
                pl.BlockSpec((tile_m, cin_p), lambda i: (i, 0)),               # x row tile
                _resident_spec((cin_p, cout_p), cin_p * cout_p * in_bytes),    # W1
                _resident_spec((1, cout_p), cout_p * elem_bytes),              # b1
                _resident_spec((cout_p, cout_p), cout_p * cout_p * in_bytes),  # W2
                _resident_spec((1, cout_p), cout_p * elem_bytes),              # b2
            ],
            out_specs=pl.BlockSpec((tile_m, cout_p), lambda i: (i, 0)),
        ),
        compiler_params=pltpu.CompilerParams(
            dimension_semantics=("parallel",),   # row tiles split across v7x's 2 TCs
            vmem_limit_bytes=vmem_limit,
        ),
        cost_estimate=cost,
    )(x2d, w1, b1, w2, b2)

    out = out[:m, :cout]
    return out.reshape(*orig_shape[:-1], cout)


def init_params(key, in_channels, out_channels, dtype=jnp.float32):
    """Deterministic init mimicking nn.Linear's U(-1/sqrt(fan_in), 1/sqrt(fan_in))."""
    k1, k2, k3, k4 = jax.random.split(key, 4)
    lim1 = 1.0 / jnp.sqrt(jnp.asarray(in_channels, dtype))
    lim2 = 1.0 / jnp.sqrt(jnp.asarray(out_channels, dtype))
    # Weights stored as (in, out) so the kernel computes x @ W (== PyTorch x @ W.T).
    w1 = jax.random.uniform(k1, (in_channels, out_channels), dtype, -lim1, lim1)
    b1 = jax.random.uniform(k2, (out_channels,), dtype, -lim1, lim1)
    w2 = jax.random.uniform(k3, (out_channels, out_channels), dtype, -lim2, lim2)
    b2 = jax.random.uniform(k4, (out_channels,), dtype, -lim2, lim2)
    return w1, b1, w2, b2


def unet_down_ref(x, w1, b1, w2, b2):
    h = jax.nn.gelu(x @ w1 + b1, approximate=False)
    return jax.nn.gelu(h @ w2 + b2, approximate=False)


if __name__ == "__main__":
    key = jax.random.PRNGKey(0)
    kx, kp = jax.random.split(key)

    batch, seq, in_channels, out_channels = 2, 8, 16, 32
    x = jax.random.normal(kx, (batch, seq, in_channels), jnp.float32)
    w1, b1, w2, b2 = init_params(kp, in_channels, out_channels)

    ref = unet_down_ref(x, w1, b1, w2, b2)

    # 1) Exact path: f32 matmuls + exact erf GELU (tight match with PyTorch).
    out_f32 = jax.block_until_ready(
        unet_down(x, w1, b1, w2, b2, compute_dtype=jnp.float32))
    assert out_f32.shape == (batch, seq, out_channels)
    assert jnp.allclose(out_f32, ref, atol=1e-5, rtol=1e-5), "f32 mismatch vs reference"

    # 2) Fast path (default): bf16 matmuls (f32 accum) + bf16 tanh-approx GELU.
    out_fast = jax.block_until_ready(unet_down(x, w1, b1, w2, b2))
    assert out_fast.shape == (batch, seq, out_channels)
    assert jnp.allclose(out_fast, ref, atol=5e-2, rtol=5e-2), "bf16 mismatch vs reference"

    # 3) Same fast path with weights pre-padded / pre-cast once (no per-call
    #    pad/cast HBM traffic in the wrapper).
    prep = prepare_params(w1, b1, w2, b2, compute_dtype=jnp.bfloat16)
    out_prep = jax.block_until_ready(
        unet_down(x, *prep, out_channels=out_channels))
    assert out_prep.shape == (batch, seq, out_channels)
    assert jnp.allclose(out_prep, ref, atol=5e-2, rtol=5e-2), "prepared-params mismatch"

    print("KERNEL_OK")
</pallas_src>

<mosaic_0001>
module attributes {stable_mosaic.version = 11 : i64} {
  func.func @_unet_down_kernel(%arg0: i32, %arg1: memref<16x128xf32, #tpu.memory_space<vmem>>, %arg2: memref<128x128xf32, #tpu.memory_space<vmem>>, %arg3: memref<1x128xf32, #tpu.memory_space<vmem>>, %arg4: memref<128x128xf32, #tpu.memory_space<vmem>>, %arg5: memref<1x128xf32, #tpu.memory_space<vmem>>, %arg6: memref<16x128xf32, #tpu.memory_space<vmem>>) attributes {dimension_semantics = [#tpu.dimension_semantics<parallel>], iteration_bounds = array<i64: 1>, scalar_prefetch = 0 : i64, scratch_operands = 0 : i64, tpu.core_type = #tpu.core_type<tc>, window_params = [{transform_indices = @transform_0, window_bounds = array<i64: 16, 128>}, {pipeline_mode = #tpu.pipeline_mode<synchronous>, transform_indices = @transform_1, window_bounds = array<i64: 128, 128>}, {pipeline_mode = #tpu.pipeline_mode<synchronous>, transform_indices = @transform_2, window_bounds = array<i64: 1, 128>}, {pipeline_mode = #tpu.pipeline_mode<synchronous>, transform_indices = @transform_3, window_bounds = array<i64: 128, 128>}, {pipeline_mode = #tpu.pipeline_mode<synchronous>, transform_indices = @transform_4, window_bounds = array<i64: 1, 128>}, {transform_indices = @transform_5, window_bounds = array<i64: 16, 128>}]} {
    %c0 = arith.constant 0 : index
    %c0_0 = arith.constant 0 : index
    %0 = vector.load %arg1[%c0, %c0_0] : memref<16x128xf32, #tpu.memory_space<vmem>>, vector<16x128xf32>
    %c0_1 = arith.constant 0 : index
    %c0_2 = arith.constant 0 : index
    %1 = vector.load %arg2[%c0_1, %c0_2] : memref<128x128xf32, #tpu.memory_space<vmem>>, vector<128x128xf32>
    %cst = arith.constant dense<0.000000e+00> : vector<16x128xf32>
    %2 = tpu.matmul %0, %1, %cst {dimension_numbers = #tpu.dot_dimension_numbers<[1], [0], [0], [1], [0, 0, 1, 1], [], []>} : vector<16x128xf32>, vector<128x128xf32>, vector<16x128xf32> -> vector<16x128xf32>
    %c0_3 = arith.constant 0 : index
    %c0_4 = arith.constant 0 : index
    %3 = vector.load %arg3[%c0_3, %c0_4] : memref<1x128xf32, #tpu.memory_space<vmem>>, vector<1x128xf32>
    %4 = vector.broadcast %3 : vector<1x128xf32> to vector<16x128xf32>
    %5 = arith.addf %2, %4 : vector<16x128xf32>
    %cst_5 = arith.constant 5.000000e-01 : f32
    %6 = vector.broadcast %cst_5 : f32 to vector<16x128xf32>
    %7 = arith.mulf %6, %5 : vector<16x128xf32>
    %cst_6 = arith.constant 0.707106769 : f32
    %8 = vector.broadcast %cst_6 : f32 to vector<16x128xf32>
    %9 = arith.mulf %5, %8 : vector<16x128xf32>
    %10 = math.erf %9 : vector<16x128xf32>
    %cst_7 = arith.constant 1.000000e+00 : f32
    %11 = vector.broadcast %cst_7 : f32 to vector<16x128xf32>
    %12 = arith.addf %11, %10 : vector<16x128xf32>
    %13 = arith.mulf %7, %12 : vector<16x128xf32>
    %c0_8 = arith.constant 0 : index
    %c0_9 = arith.constant 0 : index
    %14 = vector.load %arg4[%c0_8, %c0_9] : memref<128x128xf32, #tpu.memory_space<vmem>>, vector<128x128xf32>
    %cst_10 = arith.constant dense<0.000000e+00> : vector<16x128xf32>
    %15 = tpu.matmul %13, %14, %cst_10 {dimension_numbers = #tpu.dot_dimension_numbers<[1], [0], [0], [1], [0, 0, 1, 1], [], []>} : vector<16x128xf32>, vector<128x128xf32>, vector<16x128xf32> -> vector<16x128xf32>
    %c0_11 = arith.constant 0 : index
    %c0_12 = arith.constant 0 : index
    %16 = vector.load %arg5[%c0_11, %c0_12] : memref<1x128xf32, #tpu.memory_space<vmem>>, vector<1x128xf32>
    %17 = vector.broadcast %16 : vector<1x128xf32> to vector<16x128xf32>
    %18 = arith.addf %15, %17 : vector<16x128xf32>
    %cst_13 = arith.constant 5.000000e-01 : f32
    %19 = vector.broadcast %cst_13 : f32 to vector<16x128xf32>
    %20 = arith.mulf %19, %18 : vector<16x128xf32>
    %cst_14 = arith.constant 0.707106769 : f32
    %21 = vector.broadcast %cst_14 : f32 to vector<16x128xf32>
    %22 = arith.mulf %18, %21 : vector<16x128xf32>
    %23 = math.erf %22 : vector<16x128xf32>
    %cst_15 = arith.constant 1.000000e+00 : f32
    %24 = vector.broadcast %cst_15 : f32 to vector<16x128xf32>
    %25 = arith.addf %24, %23 : vector<16x128xf32>
    %26 = arith.mulf %20, %25 : vector<16x128xf32>
    %c0_16 = arith.constant 0 : index
    %c0_17 = arith.constant 0 : index
    %27 = vector.load %arg6[%c0_16, %c0_17] : memref<16x128xf32, #tpu.memory_space<vmem>>, vector<16x128xf32>
    tpu.vector_store %arg6[%c0_16, %c0_17], %26 {strides = array<i32>} : memref<16x128xf32, #tpu.memory_space<vmem>>, vector<16x128xf32>,
    return
  }
  func.func @transform_0(%arg0: i32) -> (i32, i32) {
    %c0_i32 = arith.constant 0 : i32
    %c0_i32_0 = arith.constant 0 : i32
    return %arg0, %c0_i32 : i32, i32
  }
  func.func @transform_1(%arg0: i32) -> (i32, i32) {
    %c0_i32 = arith.constant 0 : i32
    %c0_i32_0 = arith.constant 0 : i32
    %c0_i32_1 = arith.constant 0 : i32
    return %c0_i32, %c0_i32_0 : i32, i32
  }
  func.func @transform_2(%arg0: i32) -> (i32, i32) {
    %c0_i32 = arith.constant 0 : i32
    %c0_i32_0 = arith.constant 0 : i32
    %c0_i32_1 = arith.constant 0 : i32
    return %c0_i32, %c0_i32_0 : i32, i32
  }
  func.func @transform_3(%arg0: i32) -> (i32, i32) {
    %c0_i32 = arith.constant 0 : i32
    %c0_i32_0 = arith.constant 0 : i32
    %c0_i32_1 = arith.constant 0 : i32
    return %c0_i32, %c0_i32_0 : i32, i32
  }
  func.func @transform_4(%arg0: i32) -> (i32, i32) {
    %c0_i32 = arith.constant 0 : i32
    %c0_i32_0 = arith.constant 0 : i32
    %c0_i32_1 = arith.constant 0 : i32
    return %c0_i32, %c0_i32_0 : i32, i32
  }
  func.func @transform_5(%arg0: i32) -> (i32, i32) {
    %c0_i32 = arith.constant 0 : i32
    %c0_i32_0 = arith.constant 0 : i32
    return %arg0, %c0_i32 : i32, i32
  }
}

</mosaic_0001>

<llo_original>
// kernel: unet_down.1
$region0: #{unet_down.1}
  #allocation0 [shape = 'u32[]', space=smem, size = 0x4, offset = 0x4, fixed_abs, tag = 'smem constant byte address 0x4 - core index']
  #allocation1 [shape = 'u32[144,128]{1,0:T(1,128)}', space=vmem, size = 0x12000, scoped, tag = 'internal scratch']
  %s0 = inlined_call_operand.vmem [shape: f32[16,128], index: 0, kind: input, shape index: {}]
  %s1 = inlined_call_operand.vmem [shape: f32[128,128], index: 1, kind: input, shape index: {}]
  %s2 = inlined_call_operand.vmem [shape: f32[1,128], index: 2, kind: input, shape index: {}]
  %s3 = inlined_call_operand.vmem [shape: f32[128,128], index: 3, kind: input, shape index: {}]
  %s4 = inlined_call_operand.vmem [shape: f32[1,128], index: 4, kind: input, shape index: {}]
  %s5 = inlined_call_operand.vmem [shape: f32[16,128], index: 5, kind: output, shape index: {}]
  %s6 = sld [smem:[#allocation0]]
  $region30: #{unet_down.1} parent=0
    _
  %s8 = ssub.s32 1, %s6
  %s9 = scalar_select 0, %s8, %s6
  // Predicated region
  $region2: #{unet_down.1} parent=0 // pred_check
    _
  $region3: #{unet_down.1} parent=0 // pred_check_branch
    %11 = sbr.rel (0) target = $region5
  $region4: #{unet_down.1} parent=0 // pred_region
    _
  $region5: #{unet_down.1} parent=0 // pred_fallthru
    _
  // Predicated region
  $region6: #{unet_down.1} parent=0 // pred_check
    _
  $region7: #{unet_down.1} parent=0 // pred_check_branch
    %13 = sbr.rel (0) target = $region9
  $region8: #{unet_down.1} parent=0 // pred_region
    _
  $region9: #{unet_down.1} parent=0 // pred_fallthru
    _
  // Predicated region
  $region10: #{unet_down.1} parent=0 // pred_check
    _
  $region11: #{unet_down.1} parent=0 // pred_check_branch
    %15 = sbr.rel (0) target = $region13
  $region12: #{unet_down.1} parent=0 // pred_region
    _
  $region13: #{unet_down.1} parent=0 // pred_fallthru
    _
  // Predicated region
  $region14: #{unet_down.1} parent=0 // pred_check
    _
  $region15: #{unet_down.1} parent=0 // pred_check_branch
    %17 = sbr.rel (0) target = $region17
  $region16: #{unet_down.1} parent=0 // pred_region
    _
  $region17: #{unet_down.1} parent=0 // pred_fallthru
    _
  // Predicated region
  $region18: #{unet_down.1} parent=0 // pred_check
    _
  $region19: #{unet_down.1} parent=0 // pred_check_branch
    %19 = sbr.rel (0) target = $region21
  $region20: #{unet_down.1} parent=0 // pred_region
    _
  $region21: #{unet_down.1} parent=0 // pred_fallthru
    _
  %v20 = vld [vmem:[%s0] sm:$0xff]
  %v21 = vld [vmem:[%s0 + $0x8] sm:$0xff]
  %v22 = vld [vmem:[%s1] sm:$0xff]
  %v23 = vld [vmem:[%s1 + $0x8] sm:$0xff]
  %v24 = vld [vmem:[%s1 + $0x10] sm:$0xff]
  %v25 = vld [vmem:[%s1 + $0x18] sm:$0xff]
  %v26 = vld [vmem:[%s1 + $0x20] sm:$0xff]
  %v27 = vld [vmem:[%s1 + $0x28] sm:$0xff]
  %v28 = vld [vmem:[%s1 + $0x30] sm:$0xff]
  %v29 = vld [vmem:[%s1 + $0x38] sm:$0xff]
  %v30 = vld [vmem:[%s1 + $0x40] sm:$0xff]
  %v31 = vld [vmem:[%s1 + $0x48] sm:$0xff]
  %v32 = vld [vmem:[%s1 + $0x50] sm:$0xff]
  %v33 = vld [vmem:[%s1 + $0x58] sm:$0xff]
  %v34 = vld [vmem:[%s1 + $0x60] sm:$0xff]
  %v35 = vld [vmem:[%s1 + $0x68] sm:$0xff]
  %v36 = vld [vmem:[%s1 + $0x70] sm:$0xff]
  %v37 = vld [vmem:[%s1 + $0x78] sm:$0xff]
  %v38 = vld [vmem:[%s2] sm:$0x1]
  %v40 = vlaneseq
  %v41 = vshrl.u32 %v40, 7
  %v42 = vsub.s32 0, %v41
  %v43 = vrot.slane %v38, %v42
  %45 = vmatprep.subr.mxu0 0.0
  %46 = vmatpush1.msra.mxu0 %v22
  %47 = vmatprep.subr.mxu0 0.0
  %48 = vmatpush1.msra.mxu0 %v23
  %49 = vmatprep.subr.mxu0 0.0
  %50 = vmatpush1.msra.mxu0 %v24
  %51 = vmatprep.subr.mxu0 0.0
  %52 = vmatpush1.msra.mxu0 %v25
  %53 = vmatprep.subr.mxu0 0.0
  %54 = vmatpush1.msra.mxu0 %v26
  %55 = vmatprep.subr.mxu0 0.0
  %56 = vmatpush1.msra.mxu0 %v27
  %57 = vmatprep.subr.mxu0 0.0
  %58 = vmatpush1.msra.mxu0 %v28
  %59 = vmatprep.subr.mxu0 0.0
  %60 = vmatpush1.msra.mxu0 %v29
  %61 = vmatprep.subr.mxu0 0.0
  %62 = vmatpush1.msra.mxu0 %v30
  %63 = vmatprep.subr.mxu0 0.0
  %64 = vmatpush1.msra.mxu0 %v31
  %65 = vmatprep.subr.mxu0 0.0
  %66 = vmatpush1.msra.mxu0 %v32
  %67 = vmatprep.subr.mxu0 0.0
  %68 = vmatpush1.msra.mxu0 %v33
  %69 = vmatprep.subr.mxu0 0.0
  %70 = vmatpush1.msra.mxu0 %v34
  %71 = vmatprep.subr.mxu0 0.0
  %72 = vmatpush1.msra.mxu0 %v35
  %73 = vmatprep.subr.mxu0 0.0
  %74 = vmatpush1.msra.mxu0 %v36
  %75 = vmatprep.subr.mxu0 0.0
  %76 = vmatpush1.msra.mxu0 %v37
  %77 = vmatprep.subr.mxu0 0.0
  %78 = vmatpush1.msra.mxu0 0.0
  %79 = vmatprep.subr.mxu0 0.0
  %80 = vmatpush1.msra.mxu0 0.0
  %81 = vmatprep.subr.mxu0 0.0
  %82 = vmatpush1.msra.mxu0 0.0
  %83 = vmatprep.subr.mxu0 0.0
  %84 = vmatpush1.msra.mxu0 0.0
  %85 = vmatprep.subr.mxu0 0.0
  %86 = vmatpush1.msra.mxu0 0.0
  %87 = vmatprep.subr.mxu0 0.0
  %88 = vmatpush1.msra.mxu0 0.0
  %89 = vmatprep.subr.mxu0 0.0
  %90 = vmatpush1.msra.mxu0 0.0
  %91 = vmatprep.subr.mxu0 0.0
  %92 = vmatpush1.msra.mxu0 0.0
  %93 = vmatprep.subr.mxu0 0.0
  %94 = vmatpush1.msra.mxu0 0.0
  %95 = vmatprep.subr.mxu0 0.0
  %96 = vmatpush1.msra.mxu0 0.0
  %97 = vmatprep.subr.mxu0 0.0
  %98 = vmatpush1.msra.mxu0 0.0
  %99 = vmatprep.subr.mxu0 0.0
  %100 = vmatpush1.msra.mxu0 0.0
  %101 = vmatprep.subr.mxu0 0.0
  %102 = vmatpush1.msra.mxu0 0.0
  %103 = vmatprep.subr.mxu0 0.0
  %104 = vmatpush1.msra.mxu0 0.0
  %105 = vmatprep.subr.mxu0 0.0
  %106 = vmatpush1.msra.mxu0 0.0
  %107 = vmatprep.subr.mxu0 0.0
  %108 = vmatpush1.msra.mxu0 0.0
  %109 = vmatprep.mubr.f32.mxu0 0.0
  %110 = vmatmul.mubr.f32.gmra.mrb[0].mxu0 %v20
  %v111 = vpop.f32.mrb[0].mxu0
  %v112 = vadd.f32 %v43, %v111
  %v113 = vpop.f32.mrb[0].mxu0
  %114 = vmatprep.mubr.f32.mxu0 0.0
  %115 = vmatmul.mubr.f32.gmra.mrb[0].mxu0 %v21
  %v116 = vpop.f32.mrb[0].mxu0
  %v117 = vadd.f32 %v43, %v116
  %v118 = vpop.f32.mrb[0].mxu0
  %119 = vdwg.mxu0
  %v120 = vmul.f32 %v112, 0.5
  %v121 = vmul.f32 %v117, 0.5
  %v122 = vmul.f32 %v112, 0.70710677
  %v123 = vmul.f32 %v117, 0.70710677
  %v124 = verf.f32.pop %v122
  %v125 = verf.f32.pop %v123
  %v126 = vadd.f32 %v124, 1.0
  %v127 = vadd.f32 %v125, 1.0
  %v128 = vmul.f32 %v120, %v126
  %v129 = vmul.f32 %v121, %v127
  %v130 = vld [vmem:[%s3] sm:$0xff]
  %v131 = vld [vmem:[%s3 + $0x8] sm:$0xff]
  %v132 = vld [vmem:[%s3 + $0x10] sm:$0xff]
  %v133 = vld [vmem:[%s3 + $0x18] sm:$0xff]
  %v134 = vld [vmem:[%s3 + $0x20] sm:$0xff]
  %v135 = vld [vmem:[%s3 + $0x28] sm:$0xff]
  %v136 = vld [vmem:[%s3 + $0x30] sm:$0xff]
  %v137 = vld [vmem:[%s3 + $0x38] sm:$0xff]
  %v138 = vld [vmem:[%s3 + $0x40] sm:$0xff]
  %v139 = vld [vmem:[%s3 + $0x48] sm:$0xff]
  %v140 = vld [vmem:[%s3 + $0x50] sm:$0xff]
  %v141 = vld [vmem:[%s3 + $0x58] sm:$0xff]
  %v142 = vld [vmem:[%s3 + $0x60] sm:$0xff]
  %v143 = vld [vmem:[%s3 + $0x68] sm:$0xff]
  %v144 = vld [vmem:[%s3 + $0x70] sm:$0xff]
  %v145 = vld [vmem:[%s3 + $0x78] sm:$0xff]
  %v146 = vld [vmem:[%s4] sm:$0x1]
  %v148 = vlaneseq
  %v149 = vshrl.u32 %v148, 7
  %v150 = vsub.s32 0, %v149
  %v151 = vrot.slane %v146, %v150
  %153 = vmatprep.subr.mxu0 0.0
  %154 = vmatpush1.msra.mxu0 %v130
  %155 = vmatprep.subr.mxu0 0.0
  %156 = vmatpush1.msra.mxu0 %v131
  %157 = vmatprep.subr.mxu0 0.0
  %158 = vmatpush1.msra.mxu0 %v132
  %159 = vmatprep.subr.mxu0 0.0
  %160 = vmatpush1.msra.mxu0 %v133
  %161 = vmatprep.subr.mxu0 0.0
  %162 = vmatpush1.msra.mxu0 %v134
  %163 = vmatprep.subr.mxu0 0.0
  %164 = vmatpush1.msra.mxu0 %v135
  %165 = vmatprep.subr.mxu0 0.0
  %166 = vmatpush1.msra.mxu0 %v136
  %167 = vmatprep.subr.mxu0 0.0
  %168 = vmatpush1.msra.mxu0 %v137
  %169 = vmatprep.subr.mxu0 0.0
  %170 = vmatpush1.msra.mxu0 %v138
  %171 = vmatprep.subr.mxu0 0.0
  %172 = vmatpush1.msra.mxu0 %v139
  %173 = vmatprep.subr.mxu0 0.0
  %174 = vmatpush1.msra.mxu0 %v140
  %175 = vmatprep.subr.mxu0 0.0
  %176 = vmatpush1.msra.mxu0 %v141
  %177 = vmatprep.subr.mxu0 0.0
  %178 = vmatpush1.msra.mxu0 %v142
  %179 = vmatprep.subr.mxu0 0.0
  %180 = vmatpush1.msra.mxu0 %v143
  %181 = vmatprep.subr.mxu0 0.0
  %182 = vmatpush1.msra.mxu0 %v144
  %183 = vmatprep.subr.mxu0 0.0
  %184 = vmatpush1.msra.mxu0 %v145
  %185 = vmatprep.subr.mxu0 0.0
  %186 = vmatpush1.msra.mxu0 0.0
  %187 = vmatprep.subr.mxu0 0.0
  %188 = vmatpush1.msra.mxu0 0.0
  %189 = vmatprep.subr.mxu0 0.0
  %190 = vmatpush1.msra.mxu0 0.0
  %191 = vmatprep.subr.mxu0 0.0
  %192 = vmatpush1.msra.mxu0 0.0
  %193 = vmatprep.subr.mxu0 0.0
  %194 = vmatpush1.msra.mxu0 0.0
  %195 = vmatprep.subr.mxu0 0.0
  %196 = vmatpush1.msra.mxu0 0.0
  %197 = vmatprep.subr.mxu0 0.0
  %198 = vmatpush1.msra.mxu0 0.0
  %199 = vmatprep.subr.mxu0 0.0
  %200 = vmatpush1.msra.mxu0 0.0
  %201 = vmatprep.subr.mxu0 0.0
  %202 = vmatpush1.msra.mxu0 0.0
  %203 = vmatprep.subr.mxu0 0.0
  %204 = vmatpush1.msra.mxu0 0.0
  %205 = vmatprep.subr.mxu0 0.0
  %206 = vmatpush1.msra.mxu0 0.0
  %207 = vmatprep.subr.mxu0 0.0
  %208 = vmatpush1.msra.mxu0 0.0
  %209 = vmatprep.subr.mxu0 0.0
  %210 = vmatpush1.msra.mxu0 0.0
  %211 = vmatprep.subr.mxu0 0.0
  %212 = vmatpush1.msra.mxu0 0.0
  %213 = vmatprep.subr.mxu0 0.0
  %214 = vmatpush1.msra.mxu0 0.0
  %215 = vmatprep.subr.mxu0 0.0
  %216 = vmatpush1.msra.mxu0 0.0
  %217 = vmatprep.mubr.f32.mxu0 0.0
  %218 = vmatmul.mubr.f32.gmra.mrb[0].mxu0 %v128
  %v219 = vpop.f32.mrb[0].mxu0
  %v220 = vadd.f32 %v151, %v219
  %v221 = vpop.f32.mrb[0].mxu0
  %222 = vmatprep.mubr.f32.mxu0 0.0
  %223 = vmatmul.mubr.f32.gmra.mrb[0].mxu0 %v129
  %v224 = vpop.f32.mrb[0].mxu0
  %v225 = vadd.f32 %v151, %v224
  %v226 = vpop.f32.mrb[0].mxu0
  %227 = vdwg.mxu0
  %v228 = vmul.f32 %v220, 0.5
  %v229 = vmul.f32 %v225, 0.5
  %v230 = vmul.f32 %v220, 0.70710677
  %v231 = vmul.f32 %v225, 0.70710677
  %v232 = verf.f32.pop %v230
  %v233 = verf.f32.pop %v231
  %v234 = vadd.f32 %v232, 1.0
  %v235 = vadd.f32 %v233, 1.0
  %v236 = vmul.f32 %v228, %v234
  %v237 = vmul.f32 %v229, %v235
  %238 = vst [vmem:[%s5] sm:$0xff] %v236
  %239 = vst [vmem:[%s5 + $0x8] sm:$0xff] %v237
  // Predicated region
  $region22: #{unet_down.1} parent=0 // pred_check
    _
  $region23: #{unet_down.1} parent=0 // pred_check_branch
    %241 = sbr.rel (0) target = $region25
  $region24: #{unet_down.1} parent=0 // pred_region
    _
  $region25: #{unet_down.1} parent=0 // pred_fallthru
    _
  // Predicated region
  $region26: #{unet_down.1} parent=0 // pred_check
    _
  $region27: #{unet_down.1} parent=0 // pred_check_branch
    %243 = sbr.rel (0) target = $region29
  $region28: #{unet_down.1} parent=0 // pred_region
    _
  $region29: #{unet_down.1} parent=0 // pred_fallthru
    _

</llo_original>
